<compile_context>
chip_gen: v7x
topology: tpu7x:2x2x1
jax: 0.10.0
libtpu: 0.0.40
codegen_flags: <defaults>
</compile_context>

<pallas_src>
import numpy as np

import jax
import jax.numpy as jnp
from jax.experimental import pallas as pl
from jax.experimental.pallas import tpu as pltpu

LANE = 128  # lane alignment used when packing the hidden blocks


# ----------------------------------------------------------------------------
# Kernel
# ----------------------------------------------------------------------------
def safe_policy_3phase_kernel(state_ref, e_ref, bias_ref, wcat_ref, out_ref):
    s = state_ref[...]                                             # (bB, P)
    # MXU: broadcast each phase's scalar voltage onto its +/- hidden blocks.
    se = jnp.dot(s, e_ref[...], preferred_element_type=jnp.float32)     # (bB, 2*Kp)
    # VPU: relu(+s + b_plus) on the plus half, relu(-s + b_minus) on the minus
    # half; the deadband-correction units (-1.03 / +0.97 biases) ride along.
    act = jnp.maximum(se + bias_ref[...], 0.0)                      # (bB, 2*Kp)
    # MXU: block-diagonal contraction straight into the (bB, P) output block.
    out_ref[...] = jnp.dot(act, wcat_ref[...],
                           preferred_element_type=jnp.float32)      # (bB, P)


# ----------------------------------------------------------------------------
# Wrapper
# ----------------------------------------------------------------------------
def safe_policy_3phase(state, e_mat, bias, wcat, *, block_b=None):
    """Run the packed SafePolicy3phase forward. Returns (B, P) actions.

    block_b=None (default): grid-free, whole arrays resident in VMEM.
    block_b=k: tile the batch axis into B//k blocks marked "parallel"
               (use B//2 on v7x to shard across its two TensorCores).
    """
    B, P = state.shape
    Pe, W = e_mat.shape
    assert Pe == P and bias.shape == (1, W) and wcat.shape == (W, P)
    state = state.astype(jnp.float32)

    cost = pl.CostEstimate(
        flops=int(4 * B * P * W),                   # two matmuls, K=N=P each side
        transcendentals=0,
        bytes_accessed=int(4 * (2 * B * P + P * W + W + W * P)),
    )

    if block_b is None or block_b >= B:
        # Grid-free path: no pipeline bookkeeping; everything fits VMEM easily
        # (state/out are only B*P*4 bytes each; params ~4 KB).
        return pl.pallas_call(
            safe_policy_3phase_kernel,
            out_shape=jax.ShapeDtypeStruct((B, P), jnp.float32),
            in_specs=[pl.BlockSpec(memory_space=pltpu.MemorySpace.VMEM)] * 4,
            out_specs=pl.BlockSpec(memory_space=pltpu.MemorySpace.VMEM),
            cost_estimate=cost,
        )(state, e_mat, bias, wcat)

    # Opt-in batch tiling (v7x megacore / extremely large B).
    if B % block_b != 0 or block_b % 8 != 0:
        raise ValueError("block_b must divide B and be a multiple of 8")
    return pl.pallas_call(
        safe_policy_3phase_kernel,
        out_shape=jax.ShapeDtypeStruct((B, P), jnp.float32),
        grid=(B // block_b,),
        in_specs=[
            pl.BlockSpec((block_b, P), lambda i: (i, 0)),      # state block
            pl.BlockSpec((Pe, W), lambda i: (0, 0)),           # E: grid-invariant
            pl.BlockSpec((1, W), lambda i: (0, 0)),            # bias: grid-invariant
            pl.BlockSpec((W, P), lambda i: (0, 0)),            # wcat: grid-invariant
        ],
        out_specs=pl.BlockSpec((block_b, P), lambda i: (i, 0)),
        compiler_params=pltpu.CompilerParams(
            dimension_semantics=("parallel",)),                 # shards on v7x
        cost_estimate=cost,
    )(state, e_mat, bias, wcat)


# ----------------------------------------------------------------------------
# Parameter packing (init-time, parameter-only -> plain NumPy/JAX glue)
# ----------------------------------------------------------------------------
def pack_params(w_plus, w_minus, b_plus, b_minus):
    """Pack per-phase params + the +/-0.03 deadband correction into E/bias/wcat."""
    wp = np.asarray(w_plus, np.float32)
    wm = np.asarray(w_minus, np.float32)
    bp = np.asarray(b_plus, np.float32)
    bm = np.asarray(b_minus, np.float32)
    P, H = wp.shape

    Hc = H + 1                                           # +1 deadband unit / block
    half = ((P * Hc + LANE - 1) // LANE) * LANE          # lane-aligned half width
    W = 2 * half                                         # [ plus half | minus half ]

    E = np.zeros((P, W), np.float32)
    bias = np.zeros((1, W), np.float32)
    wcat = np.zeros((W, P), np.float32)
    for p in range(P):
        lo_p = p * Hc                                    # plus block of phase p
        lo_m = half + p * Hc                             # minus block of phase p
        E[p, lo_p:lo_p + Hc] = 1.0
        E[p, lo_m:lo_m + Hc] = -1.0
        bias[0, lo_p:lo_p + H] = bp[p]
        bias[0, lo_p + H] = -1.03                        # +0.1 * relu(s - 1.03)
        bias[0, lo_m:lo_m + H] = bm[p]
        bias[0, lo_m + H] = 0.97                         # -0.1 * relu(0.97 - s)
        wcat[lo_p:lo_p + H, p] = wp[p]
        wcat[lo_p + H, p] = 0.1
        wcat[lo_m:lo_m + H, p] = wm[p]
        wcat[lo_m + H, p] = -0.1

    return jnp.asarray(E), jnp.asarray(bias), jnp.asarray(wcat)


def make_phase_params(key, hidden_dim, action_dim=1, scale=0.15, vmax=1.05, vmin=0.95):
    """Synthetic init mirroring SafePolicyNetwork.__init__ plus the parameter
    preprocessing done at the start of SafePolicyNetwork.forward."""
    H = hidden_dim
    kq, kb, kc = jax.random.split(key, 3)

    q = jax.random.uniform(kq, (action_dim, H), dtype=jnp.float32)   # torch.rand
    b = jax.random.uniform(kb, (H,), dtype=jnp.float32)
    b = b / jnp.sum(b) * scale
    _c = jax.random.uniform(kc, (H,), dtype=jnp.float32)  # 'c' exists, unused in forward

    ones = jnp.ones((H, H), jnp.float32)
    eye = jnp.eye(H, dtype=jnp.float32)
    w_recover = -jnp.triu(ones, 0) + jnp.triu(ones, 2) + 2.0 * eye
    b_recover = jnp.triu(ones, 0) - eye

    w_plus = jnp.square(q) @ w_recover           # (1, H)
    w_minus = (-jnp.square(q)) @ w_recover       # (1, H)

    # forward()-time renormalization of b (mirrors the torch in-place update).
    b = jnp.clip(b, 0.0, None)
    b = scale * b / jnp.sum(jnp.abs(b))
    b_plus = (-b) @ b_recover - (vmax - 0.02)    # (H,)
    b_minus = (-b) @ b_recover + (vmin + 0.02)   # (H,)

    return w_plus[0], w_minus[0], b_plus, b_minus


def reference_forward(state, w_plus, w_minus, b_plus, b_minus):
    """Pure-JAX reference of SafePolicy3phase.forward (stacked (P,H) layout)."""
    s = state.astype(jnp.float32)
    hid_p = jnp.maximum(s[:, :, None] + b_plus[None, :, :], 0.0)
    hid_m = jnp.maximum(-s[:, :, None] + b_minus[None, :, :], 0.0)
    acc = jnp.sum(hid_p * w_plus[None, :, :] + hid_m * w_minus[None, :, :], axis=-1)
    corr = (jnp.maximum(s - 1.03, 0.0) - jnp.maximum(0.97 - s, 0.0)) * 0.1
    return acc + corr


# ----------------------------------------------------------------------------
# Demo / correctness check
# ----------------------------------------------------------------------------
if __name__ == "__main__":
    # Synthetic env: injection_bus[bus_id] = 'abc' (3 phases), vmax=1.05, vmin=0.95.
    B, H, P = 8, 32, 3
    scale, vmax, vmin = 0.15, 1.05, 0.95

    key = jax.random.PRNGKey(0)
    k_state, k_state_big, k_a, k_b, k_c = jax.random.split(key, 5)

    # Voltages around 1.0 p.u. so the +/-0.03 deadband correction is exercised.
    state = jax.random.uniform(k_state, (B, P), jnp.float32,
                               minval=0.90, maxval=1.10)

    wps, wms, bps, bms = [], [], [], []
    for kp in (k_a, k_b, k_c):                 # one SafePolicyNetwork per phase
        wp, wm, bp, bm = make_phase_params(kp, H, action_dim=1, scale=scale,
                                           vmax=vmax, vmin=vmin)
        wps.append(wp); wms.append(wm); bps.append(bp); bms.append(bm)

    w_plus = jnp.stack(wps, axis=0)     # (P, H)
    w_minus = jnp.stack(wms, axis=0)    # (P, H)
    b_plus = jnp.stack(bps, axis=0)     # (P, H)
    b_minus = jnp.stack(bms, axis=0)    # (P, H)

    e_mat, bias, wcat = pack_params(w_plus, w_minus, b_plus, b_minus)

    # Small batch: grid-free path.  (For B this tiny, plain jnp would also do;
    # kept on the kernel path to exercise it.)
    out = safe_policy_3phase(state, e_mat, bias, wcat)
    out = jax.block_until_ready(out)
    ref = reference_forward(state, w_plus, w_minus, b_plus, b_minus)
    assert out.shape == (B, P)
    assert jnp.allclose(out, ref, atol=1e-4, rtol=1e-4), "small-batch mismatch"

    # Large batch, grid-free (preferred on v5e/v6e: single TC, fewer/bigger
    # blocks win; (B,P) I/O keeps VMEM tiny so no tiling is needed).
    B_big = 2048
    state_big = jax.random.uniform(k_state_big, (B_big, P), jnp.float32,
                                   minval=0.90, maxval=1.10)
    ref_big = reference_forward(state_big, w_plus, w_minus, b_plus, b_minus)

    out_big = safe_policy_3phase(state_big, e_mat, bias, wcat)
    out_big = jax.block_until_ready(out_big)
    assert out_big.shape == (B_big, P)
    assert jnp.allclose(out_big, ref_big, atol=1e-4, rtol=1e-4), "grid-free mismatch"

    # Large batch, 2-way batch-tiled "parallel" grid (v7x: one block per
    # TensorCore; on v5e/v6e this is just a 2-step serial loop).
    out_tiled = safe_policy_3phase(state_big, e_mat, bias, wcat,
                                   block_b=B_big // 2)
    out_tiled = jax.block_until_ready(out_tiled)
    assert out_tiled.shape == (B_big, P)
    assert jnp.allclose(out_tiled, ref_big, atol=1e-4, rtol=1e-4), "tiled mismatch"

    print("KERNEL_OK")
</pallas_src>

<mosaic_0001>
module attributes {stable_mosaic.version = 11 : i64} {
  func.func @safe_policy_3phase_kernel(%arg0: memref<8x3xf32, #tpu.memory_space<vmem>>, %arg1: memref<3x256xf32, #tpu.memory_space<vmem>>, %arg2: memref<1x256xf32, #tpu.memory_space<vmem>>, %arg3: memref<256x3xf32, #tpu.memory_space<vmem>>, %arg4: memref<8x3xf32, #tpu.memory_space<vmem>>) attributes {dimension_semantics = [], scalar_prefetch = 0 : i64, scratch_operands = 0 : i64, tpu.core_type = #tpu.core_type<tc>} {
    %c0 = arith.constant 0 : index
    %c0_0 = arith.constant 0 : index
    %0 = vector.load %arg0[%c0, %c0_0] : memref<8x3xf32, #tpu.memory_space<vmem>>, vector<8x3xf32>
    %c0_1 = arith.constant 0 : index
    %c0_2 = arith.constant 0 : index
    %1 = vector.load %arg1[%c0_1, %c0_2] : memref<3x256xf32, #tpu.memory_space<vmem>>, vector<3x256xf32>
    %cst = arith.constant dense<0.000000e+00> : vector<8x256xf32>
    %2 = tpu.matmul %0, %1, %cst {dimension_numbers = #tpu.dot_dimension_numbers<[1], [0], [0], [1], [0, 0, 1, 1], [], []>} : vector<8x3xf32>, vector<3x256xf32>, vector<8x256xf32> -> vector<8x256xf32>
    %c0_3 = arith.constant 0 : index
    %c0_4 = arith.constant 0 : index
    %3 = vector.load %arg2[%c0_3, %c0_4] : memref<1x256xf32, #tpu.memory_space<vmem>>, vector<1x256xf32>
    %4 = vector.broadcast %3 : vector<1x256xf32> to vector<8x256xf32>
    %5 = arith.addf %2, %4 : vector<8x256xf32>
    %cst_5 = arith.constant 0.000000e+00 : f32
    %6 = vector.broadcast %cst_5 : f32 to vector<8x256xf32>
    %7 = arith.maximumf %5, %6 : vector<8x256xf32>
    %c0_6 = arith.constant 0 : index
    %c0_7 = arith.constant 0 : index
    %8 = vector.load %arg3[%c0_6, %c0_7] : memref<256x3xf32, #tpu.memory_space<vmem>>, vector<256x3xf32>
    %cst_8 = arith.constant dense<0.000000e+00> : vector<8x3xf32>
    %9 = tpu.matmul %7, %8, %cst_8 {dimension_numbers = #tpu.dot_dimension_numbers<[1], [0], [0], [1], [0, 0, 1, 1], [], []>} : vector<8x256xf32>, vector<256x3xf32>, vector<8x3xf32> -> vector<8x3xf32>
    %c0_9 = arith.constant 0 : index
    %c0_10 = arith.constant 0 : index
    %10 = vector.load %arg4[%c0_9, %c0_10] : memref<8x3xf32, #tpu.memory_space<vmem>>, vector<8x3xf32>
    tpu.vector_store %arg4[%c0_9, %c0_10], %9 {strides = array<i32>} : memref<8x3xf32, #tpu.memory_space<vmem>>, vector<8x3xf32>,
    return
  }
}

</mosaic_0001>

<llo_original>
// kernel: tpu_custom_call.1
$region0: #{tpu_custom_call.1}
  #allocation0 [shape = 'u32[]', space=smem, size = 0x4, offset = 0x4, fixed_abs, tag = 'smem constant byte address 0x4 - core index']
  #allocation1 [shape = 'u32[144,128]{1,0:T(1,128)}', space=vmem, size = 0x12000, scoped, tag = 'internal scratch']
  %s0 = inlined_call_operand.vmem [shape: f32[8,3], index: 0, kind: input, shape index: {}]
  %s1 = inlined_call_operand.vmem [shape: f32[3,256], index: 1, kind: input, shape index: {}]
  %s2 = inlined_call_operand.vmem [shape: f32[1,256], index: 2, kind: input, shape index: {}]
  %s3 = inlined_call_operand.vmem [shape: f32[256,3], index: 3, kind: input, shape index: {}]
  %s4 = inlined_call_operand.vmem [shape: f32[8,3], index: 4, kind: output, shape index: {}]
  %s5 = sld [smem:[#allocation0]]
  $region26: #{tpu_custom_call.1} parent=0
    _
  %s7 = ssub.s32 1, %s5
  %s8 = scalar_select 0, %s7, %s5
  // Predicated region
  $region2: #{tpu_custom_call.1} parent=0 // pred_check
    _
  $region3: #{tpu_custom_call.1} parent=0 // pred_check_branch
    %10 = sbr.rel (0) target = $region5
  $region4: #{tpu_custom_call.1} parent=0 // pred_region
    _
  $region5: #{tpu_custom_call.1} parent=0 // pred_fallthru
    _
  // Predicated region
  $region6: #{tpu_custom_call.1} parent=0 // pred_check
    _
  $region7: #{tpu_custom_call.1} parent=0 // pred_check_branch
    %12 = sbr.rel (0) target = $region9
  $region8: #{tpu_custom_call.1} parent=0 // pred_region
    _
  $region9: #{tpu_custom_call.1} parent=0 // pred_fallthru
    _
  // Predicated region
  $region10: #{tpu_custom_call.1} parent=0 // pred_check
    _
  $region11: #{tpu_custom_call.1} parent=0 // pred_check_branch
    %14 = sbr.rel (0) target = $region13
  $region12: #{tpu_custom_call.1} parent=0 // pred_region
    _
  $region13: #{tpu_custom_call.1} parent=0 // pred_fallthru
    _
  // Predicated region
  $region14: #{tpu_custom_call.1} parent=0 // pred_check
    _
  $region15: #{tpu_custom_call.1} parent=0 // pred_check_branch
    %16 = sbr.rel (0) target = $region17
  $region16: #{tpu_custom_call.1} parent=0 // pred_region
    _
  $region17: #{tpu_custom_call.1} parent=0 // pred_fallthru
    _
  %v17 = vld [vmem:[%s0] sm:$0xff]
  %v18 = vld [vmem:[%s1] sm:$0x77]
  %v19 = vld [vmem:[%s2] sm:$0x3]
  %v21 = vlaneseq
  %v22 = vshrl.u32 %v21, 7
  %v23 = vsub.s32 0, %v22
  %v24 = vrot.slane %v19, %v23
  %v25 = vlaneseq
  %v26 = vshrl.u32 %v25, 7
  %v27 = vsub.s32 1, %v26
  %v28 = vrot.slane %v19, %v27
  %v32 = vcombine.high %v18, %v18
  %vm33 = vcmask 23552
  %v35 = vsel %vm33, %v17, 0
  %vm37 = vcmask 1042432
  %v38 = vsel %vm37, %v18, 0
  %v40 = vsel %vm37, %v32, 0
  %42 = vmatprep.subr.mxu0 %v40
  %43 = vmatpush1.msra.mxu0 %v38
  %44 = vmatprep.subr.mxu0 0.0
  %45 = vmatpush1.msra.mxu0 0.0
  %46 = vmatprep.subr.mxu0 0.0
  %47 = vmatpush1.msra.mxu0 0.0
  %48 = vmatprep.subr.mxu0 0.0
  %49 = vmatpush1.msra.mxu0 0.0
  %50 = vmatprep.subr.mxu0 0.0
  %51 = vmatpush1.msra.mxu0 0.0
  %52 = vmatprep.subr.mxu0 0.0
  %53 = vmatpush1.msra.mxu0 0.0
  %54 = vmatprep.subr.mxu0 0.0
  %55 = vmatpush1.msra.mxu0 0.0
  %56 = vmatprep.subr.mxu0 0.0
  %57 = vmatpush1.msra.mxu0 0.0
  %58 = vmatprep.subr.mxu0 0.0
  %59 = vmatpush1.msra.mxu0 0.0
  %60 = vmatprep.subr.mxu0 0.0
  %61 = vmatpush1.msra.mxu0 0.0
  %62 = vmatprep.subr.mxu0 0.0
  %63 = vmatpush1.msra.mxu0 0.0
  %64 = vmatprep.subr.mxu0 0.0
  %65 = vmatpush1.msra.mxu0 0.0
  %66 = vmatprep.subr.mxu0 0.0
  %67 = vmatpush1.msra.mxu0 0.0
  %68 = vmatprep.subr.mxu0 0.0
  %69 = vmatpush1.msra.mxu0 0.0
  %70 = vmatprep.subr.mxu0 0.0
  %71 = vmatpush1.msra.mxu0 0.0
  %72 = vmatprep.subr.mxu0 0.0
  %73 = vmatpush1.msra.mxu0 0.0
  %74 = vmatprep.subr.mxu0 0.0
  %75 = vmatpush1.msra.mxu0 0.0
  %76 = vmatprep.subr.mxu0 0.0
  %77 = vmatpush1.msra.mxu0 0.0
  %78 = vmatprep.subr.mxu0 0.0
  %79 = vmatpush1.msra.mxu0 0.0
  %80 = vmatprep.subr.mxu0 0.0
  %81 = vmatpush1.msra.mxu0 0.0
  %82 = vmatprep.subr.mxu0 0.0
  %83 = vmatpush1.msra.mxu0 0.0
  %84 = vmatprep.subr.mxu0 0.0
  %85 = vmatpush1.msra.mxu0 0.0
  %86 = vmatprep.subr.mxu0 0.0
  %87 = vmatpush1.msra.mxu0 0.0
  %88 = vmatprep.subr.mxu0 0.0
  %89 = vmatpush1.msra.mxu0 0.0
  %90 = vmatprep.subr.mxu0 0.0
  %91 = vmatpush1.msra.mxu0 0.0
  %92 = vmatprep.subr.mxu0 0.0
  %93 = vmatpush1.msra.mxu0 0.0
  %94 = vmatprep.subr.mxu0 0.0
  %95 = vmatpush1.msra.mxu0 0.0
  %96 = vmatprep.subr.mxu0 0.0
  %97 = vmatpush1.msra.mxu0 0.0
  %98 = vmatprep.subr.mxu0 0.0
  %99 = vmatpush1.msra.mxu0 0.0
  %100 = vmatprep.subr.mxu0 0.0
  %101 = vmatpush1.msra.mxu0 0.0
  %102 = vmatprep.subr.mxu0 0.0
  %103 = vmatpush1.msra.mxu0 0.0
  %104 = vmatprep.subr.mxu0 0.0
  %105 = vmatpush1.msra.mxu0 0.0
  %106 = vmatprep.mubr.f32.mxu0 0.0
  %107 = vmatmul.mubr.f32.gmra.mrb[0].mxu0 %v35
  %v108 = vpop.f32.mrb[0].mxu0
  %v109 = vadd.f32 %v24, %v108
  %v110 = vpop.f32.mrb[0].mxu0
  %v111 = vadd.f32 %v28, %v110
  %112 = vdwg.mxu0
  %v113 = vmax.f32 %v109, 0.0
  %v114 = vmax.f32 %v111, 0.0
  %v115 = vld [vmem:[%s3] sm:$0xff]
  %v116 = vld [vmem:[%s3 + $0x8] sm:$0xff]
  %v117 = vld [vmem:[%s3 + $0x10] sm:$0xff]
  %v118 = vld [vmem:[%s3 + $0x18] sm:$0xff]
  %v119 = vld [vmem:[%s3 + $0x20] sm:$0xff]
  %v120 = vld [vmem:[%s3 + $0x28] sm:$0xff]
  %v121 = vld [vmem:[%s3 + $0x30] sm:$0xff]
  %v122 = vld [vmem:[%s3 + $0x38] sm:$0xff]
  %v123 = vld [vmem:[%s3 + $0x40] sm:$0xff]
  %v124 = vld [vmem:[%s3 + $0x48] sm:$0xff]
  %v125 = vld [vmem:[%s3 + $0x50] sm:$0xff]
  %v126 = vld [vmem:[%s3 + $0x58] sm:$0xff]
  %v127 = vld [vmem:[%s3 + $0x60] sm:$0xff]
  %v128 = vld [vmem:[%s3 + $0x68] sm:$0xff]
  %v129 = vld [vmem:[%s3 + $0x70] sm:$0xff]
  %v130 = vld [vmem:[%s3 + $0x78] sm:$0xff]
  %v131 = vld [vmem:[%s3 + $0x80] sm:$0xff]
  %v132 = vld [vmem:[%s3 + $0x88] sm:$0xff]
  %v133 = vld [vmem:[%s3 + $0x90] sm:$0xff]
  %v134 = vld [vmem:[%s3 + $0x98] sm:$0xff]
  %v135 = vld [vmem:[%s3 + $0xa0] sm:$0xff]
  %v136 = vld [vmem:[%s3 + $0xa8] sm:$0xff]
  %v137 = vld [vmem:[%s3 + $0xb0] sm:$0xff]
  %v138 = vld [vmem:[%s3 + $0xb8] sm:$0xff]
  %v139 = vld [vmem:[%s3 + $0xc0] sm:$0xff]
  %v140 = vld [vmem:[%s3 + $0xc8] sm:$0xff]
  %v141 = vld [vmem:[%s3 + $0xd0] sm:$0xff]
  %v142 = vld [vmem:[%s3 + $0xd8] sm:$0xff]
  %v143 = vld [vmem:[%s3 + $0xe0] sm:$0xff]
  %v144 = vld [vmem:[%s3 + $0xe8] sm:$0xff]
  %v145 = vld [vmem:[%s3 + $0xf0] sm:$0xff]
  %v146 = vld [vmem:[%s3 + $0xf8] sm:$0xff]
  %147 = vmatprep.subr.mxu0 0.0
  %148 = vmatpush1.msra.mxu0 %v115
  %149 = vmatprep.subr.mxu0 0.0
  %150 = vmatpush1.msra.mxu0 %v116
  %151 = vmatprep.subr.mxu0 0.0
  %152 = vmatpush1.msra.mxu0 %v117
  %153 = vmatprep.subr.mxu0 0.0
  %154 = vmatpush1.msra.mxu0 %v118
  %155 = vmatprep.subr.mxu0 0.0
  %156 = vmatpush1.msra.mxu0 %v119
  %157 = vmatprep.subr.mxu0 0.0
  %158 = vmatpush1.msra.mxu0 %v120
  %159 = vmatprep.subr.mxu0 0.0
  %160 = vmatpush1.msra.mxu0 %v121
  %161 = vmatprep.subr.mxu0 0.0
  %162 = vmatpush1.msra.mxu0 %v122
  %163 = vmatprep.subr.mxu0 0.0
  %164 = vmatpush1.msra.mxu0 %v123
  %165 = vmatprep.subr.mxu0 0.0
  %166 = vmatpush1.msra.mxu0 %v124
  %167 = vmatprep.subr.mxu0 0.0
  %168 = vmatpush1.msra.mxu0 %v125
  %169 = vmatprep.subr.mxu0 0.0
  %170 = vmatpush1.msra.mxu0 %v126
  %171 = vmatprep.subr.mxu0 0.0
  %172 = vmatpush1.msra.mxu0 %v127
  %173 = vmatprep.subr.mxu0 0.0
  %174 = vmatpush1.msra.mxu0 %v128
  %175 = vmatprep.subr.mxu0 0.0
  %176 = vmatpush1.msra.mxu0 %v129
  %177 = vmatprep.subr.mxu0 0.0
  %178 = vmatpush1.msra.mxu0 %v130
  %179 = vmatprep.subr.mxu0 0.0
  %180 = vmatpush1.msra.mxu0 %v131
  %181 = vmatprep.subr.mxu0 0.0
  %182 = vmatpush1.msra.mxu0 %v132
  %183 = vmatprep.subr.mxu0 0.0
  %184 = vmatpush1.msra.mxu0 %v133
  %185 = vmatprep.subr.mxu0 0.0
  %186 = vmatpush1.msra.mxu0 %v134
  %187 = vmatprep.subr.mxu0 0.0
  %188 = vmatpush1.msra.mxu0 %v135
  %189 = vmatprep.subr.mxu0 0.0
  %190 = vmatpush1.msra.mxu0 %v136
  %191 = vmatprep.subr.mxu0 0.0
  %192 = vmatpush1.msra.mxu0 %v137
  %193 = vmatprep.subr.mxu0 0.0
  %194 = vmatpush1.msra.mxu0 %v138
  %195 = vmatprep.subr.mxu0 0.0
  %196 = vmatpush1.msra.mxu0 %v139
  %197 = vmatprep.subr.mxu0 0.0
  %198 = vmatpush1.msra.mxu0 %v140
  %199 = vmatprep.subr.mxu0 0.0
  %200 = vmatpush1.msra.mxu0 %v141
  %201 = vmatprep.subr.mxu0 0.0
  %202 = vmatpush1.msra.mxu0 %v142
  %203 = vmatprep.subr.mxu0 0.0
  %204 = vmatpush1.msra.mxu0 %v143
  %205 = vmatprep.subr.mxu0 0.0
  %206 = vmatpush1.msra.mxu0 %v144
  %207 = vmatprep.subr.mxu0 0.0
  %208 = vmatpush1.msra.mxu0 %v145
  %209 = vmatprep.subr.mxu0 0.0
  %210 = vmatpush1.msra.mxu0 %v146
  %211 = vmatprep.mubr.f32.mxu0 %v114
  %212 = vmatmul.mubr.f32.gmra.mrb[0].mxu0 %v113
  %v213 = vpop.f32.mrb[0].mxu0
  %v214 = vadd.f32 0.0, %v213
  %v215 = vpop.f32.mrb[0].mxu0
  %216 = vdwg.mxu0
  %217 = vst.msk [vmem:[%s4] sm:$0xff] %vm33, %v214
  // Predicated region
  $region18: #{tpu_custom_call.1} parent=0 // pred_check
    _
  $region19: #{tpu_custom_call.1} parent=0 // pred_check_branch
    %219 = sbr.rel (0) target = $region21
  $region20: #{tpu_custom_call.1} parent=0 // pred_region
    _
  $region21: #{tpu_custom_call.1} parent=0 // pred_fallthru
    _
  // Predicated region
  $region22: #{tpu_custom_call.1} parent=0 // pred_check
    _
  $region23: #{tpu_custom_call.1} parent=0 // pred_check_branch
    %221 = sbr.rel (0) target = $region25
  $region24: #{tpu_custom_call.1} parent=0 // pred_region
    _
  $region25: #{tpu_custom_call.1} parent=0 // pred_fallthru
    _

</llo_original>
